<compile_context>
chip_gen: v6e
topology: v6e:2x2x1
jax: 0.10.0
libtpu: 0.0.40
codegen_flags: <defaults>
</compile_context>

<pallas_src>
import math

import jax
import jax.numpy as jnp
from jax.experimental import pallas as pl
from jax.experimental.pallas import tpu as pltpu

_LANE_WIDTH_CAP = 16384  # widest reshaped row (elements) targeted in the 2-D path
_BUDGET_CACHE = None


def _hw_budgets():
    """(target_block_bytes, vmem_limit_bytes), tuned per TPU generation."""
    global _BUDGET_CACHE
    if _BUDGET_CACHE is not None:
        return _BUDGET_CACHE
    vmem_bytes = 128 * 1024 * 1024
    try:
        info = pltpu.get_tpu_info()
        vmem_bytes = int(getattr(info, "vmem_capacity_bytes", vmem_bytes))
    except Exception:
        pass
    if vmem_bytes <= 64 * 1024 * 1024:
        # v7x: only 64 MiB VMEM/TC but 3.2 TB/s HBM -> the biggest blocks the
        # smaller headroom allows (in+out double-buffered = 4x block = 16 MiB).
        _BUDGET_CACHE = (4 * 1024 * 1024, 40 * 1024 * 1024)
    else:
        # v5e / v6e: 128 MiB VMEM -> 6 MiB blocks (24 MiB double-buffered).
        _BUDGET_CACHE = (6 * 1024 * 1024, 64 * 1024 * 1024)
    return _BUDGET_CACHE


def _sublane(dtype):
    """Sublane packing quantum: 8 for f32, 16 for bf16, 32 for int8."""
    return max(8, 32 // jnp.dtype(dtype).itemsize)


def _round_down(v, m):
    return max(m, (v // m) * m)


def _compiler_params(grid_rank, vmem_limit):
    return pltpu.CompilerParams(
        dimension_semantics=("parallel",) * grid_rank,  # pure streaming, no reduction
        vmem_limit_bytes=vmem_limit,
    )


def _pick_row_tile(rows, quantum, bytes_per_row, target_bytes, lane_blocks):
    """Row-block size: multiple of `quantum` (or full extent for tiny inputs),
    sized to ~target_bytes.  Keeps >=2 total grid steps when the data allows it
    so v7x's two TensorCores both get work along the 'parallel' axes."""
    if rows <= quantum:
        return rows
    t = max(1, target_bytes // max(bytes_per_row, 1))
    t = max(quantum, (t // quantum) * quantum)
    t = min(t, (rows // quantum) * quantum)
    if lane_blocks * pl.cdiv(rows, t) < 2:
        half = (t // 2 // quantum) * quantum
        if half >= quantum and pl.cdiv(rows, half) >= 2:
            t = half
    return t


def _add_bias_kernel(x_ref, b_ref, o_ref):
    # One VPU add per vreg; the kernel is HBM-bandwidth bound, so everything
    # interesting is in the layout/tiling around it.  The bias block broadcast
    # (width-1 lane or height-1 sublane) hides under the DMAs.
    o_ref[...] = x_ref[...].astype(o_ref.dtype) + b_ref[...]


def _add_bias_2d_dense(x, bias_c, out_dtype, target_block, vmem_limit):
    """2-D (N, C) path.  Precondition: (N * C) % lcm(C, 128) == 0."""
    N, C = x.shape
    itemsize = max(jnp.dtype(x.dtype).itemsize, jnp.dtype(out_dtype).itemsize)
    sub = max(_sublane(x.dtype), _sublane(out_dtype))

    L = (C * 128) // math.gcd(C, 128)      # lcm(C, 128): smallest lane-dense period
    r_full = (N * C) // L

    # Widen the flat view: group g rows of width L into rows of width g*L
    # (lane-dense, wide output slabs are the biggest single measured lever).
    g = max(1, min(r_full, _LANE_WIDTH_CAP // L))
    while r_full % g:
        g -= 1
    width = g * L
    rows = r_full // g

    x2 = x.reshape(rows, width)                                     # free reshape
    b_row = jnp.tile(bias_c.reshape(1, C), (1, width // C)).astype(out_dtype)

    # Lane tile: full width unless one sublane-slab would blow the block budget
    # (only for very wide bias periods, i.e. huge C not divisible by 128).
    if width * sub * itemsize <= target_block:
        tl = width
    else:
        tl = min(_round_down(target_block // (sub * itemsize), 128), width)
    lane_blocks = pl.cdiv(width, tl)

    tr = _pick_row_tile(rows, sub, tl * itemsize, target_block, lane_blocks)
    grid = (pl.cdiv(rows, tr), lane_blocks)

    out2 = pl.pallas_call(
        _add_bias_kernel,
        out_shape=jax.ShapeDtypeStruct((rows, width), out_dtype),
        grid_spec=pltpu.PrefetchScalarGridSpec(
            num_scalar_prefetch=0,
            grid=grid,
            in_specs=[
                pl.BlockSpec((tr, tl), lambda r, t: (r, t)),
                pl.BlockSpec((1, tl), lambda r, t: (0, t)),   # VMEM-resident bias row
            ],
            out_specs=pl.BlockSpec((tr, tl), lambda r, t: (r, t)),
        ),
        compiler_params=_compiler_params(2, vmem_limit),
    )(x2, b_row)
    return out2.reshape(N, C)


def _add_bias_2d(x, bias_c, out_dtype, target_block, vmem_limit):
    N, C = x.shape
    L = (C * 128) // math.gcd(C, 128)
    rows_per_group = L // C                 # x rows per lane-dense reshaped row
    n_main = (N // rows_per_group) * rows_per_group
    b_row = bias_c.reshape(1, C).astype(out_dtype)

    if n_main == N:
        return _add_bias_2d_dense(x, bias_c, out_dtype, target_block, vmem_limit)

    if n_main == 0:
        # Tiny input (< 128/gcd(C,128) rows): a fused XLA add beats any kernel
        # launch; a narrow C-lane Pallas block would be ~(128/C)x store-masked.
        return x.astype(out_dtype) + b_row

    # Lane-dense Pallas on the aligned main chunk; tiny (< rows_per_group) tail
    # via a plain add.  Trades a small slice/concat copy for removing the
    # masked-store penalty of a narrow-lane kernel on the bulk of the data.
    main = _add_bias_2d_dense(x[:n_main], bias_c, out_dtype, target_block, vmem_limit)
    tail = x[n_main:].astype(out_dtype) + b_row
    return jnp.concatenate([main, tail], axis=0)


def _add_bias_nchw(x, bias_c, out_dtype, target_block, vmem_limit):
    """4-D NCHW path on a dense (N*C, H*W) view with a resident bias column."""
    N, C, H, W = x.shape
    HW = H * W
    rows = N * C
    itemsize = max(jnp.dtype(x.dtype).itemsize, jnp.dtype(out_dtype).itemsize)
    sub = max(_sublane(x.dtype), _sublane(out_dtype))

    # Row-block quantum: multiple of C (so the bias phase is identical in every
    # block -> constant index_map, resident bias) and of the sublane tile (so
    # stores stay sublane-dense even for tiny C).
    quantum = (C * sub) // math.gcd(C, sub)      # lcm(C, sublane_tile)
    x2 = x.reshape(rows, HW)                     # free reshape (row-major)

    # Lane tile: the full HW extent when a quantum-row slab fits the budget
    # (no masked remainder column); otherwise a wide multiple of 128.
    if HW * quantum * itemsize <= target_block or HW <= 128:
        thw = HW
    else:
        thw = min(_round_down(target_block // (quantum * itemsize), 128),
                  _round_down(HW, 128))
    lane_blocks = pl.cdiv(HW, thw)

    tr = _pick_row_tile(rows, quantum, thw * itemsize, target_block, lane_blocks)
    # tr % C == 0 by construction, so one (tr, 1) column covers every block.
    b_col = jnp.tile(bias_c, (tr // C,)).reshape(tr, 1).astype(out_dtype)

    grid = (pl.cdiv(rows, tr), lane_blocks)
    out2 = pl.pallas_call(
        _add_bias_kernel,
        out_shape=jax.ShapeDtypeStruct((rows, HW), out_dtype),
        grid_spec=pltpu.PrefetchScalarGridSpec(
            num_scalar_prefetch=0,
            grid=grid,
            in_specs=[
                pl.BlockSpec((tr, thw), lambda r, t: (r, t)),
                pl.BlockSpec((tr, 1), lambda r, t: (0, 0)),   # resident bias column
            ],
            out_specs=pl.BlockSpec((tr, thw), lambda r, t: (r, t)),
        ),
        compiler_params=_compiler_params(2, vmem_limit),
    )(x2, b_col)
    return out2.reshape(N, C, H, W)


class AddBias:
    """JAX/Pallas port of the PyTorch AddBias module."""

    def __init__(self, bias):
        # Matches nn.Parameter(bias.unsqueeze(1)) -> shape (C, 1)
        self._bias = jnp.asarray(bias).reshape(-1, 1)

    def __call__(self, x):
        C = self._bias.shape[0]
        bias_c = self._bias.reshape(C)
        out_dtype = jnp.result_type(x.dtype, bias_c.dtype)   # PyTorch-style promotion
        target_block, vmem_limit = _hw_budgets()
        if x.ndim == 2:
            if x.shape[1] != C:
                raise ValueError(f"expected (N, {C}), got {x.shape}")
            return _add_bias_2d(x, bias_c, out_dtype, target_block, vmem_limit)
        if x.ndim == 4:
            if x.shape[1] != C:
                raise ValueError(f"expected (N, {C}, H, W), got {x.shape}")
            return _add_bias_nchw(x, bias_c, out_dtype, target_block, vmem_limit)
        raise ValueError(f"AddBias expects 2-D or 4-D input, got {x.ndim}-D")


if __name__ == "__main__":
    key = jax.random.PRNGKey(0)
    k_b, k_b2, k_x4, k_x4b, k_x2, k_x2b, k_x2c = jax.random.split(key, 7)

    C = 4
    bias_init = jax.random.normal(k_b, (C,), dtype=jnp.float32)
    module = AddBias(bias_init)

    def check(mod, x, ref):
        y = jax.block_until_ready(mod(x))
        assert y.shape == ref.shape and y.dtype == ref.dtype, (y.shape, y.dtype)
        assert jnp.allclose(y, ref, atol=1e-6), float(jnp.max(jnp.abs(y - ref)))

    # 4-D NCHW path: dense (N*C, H*W) view with a resident (tr, 1) bias column.
    x4 = jax.random.normal(k_x4, (2, C, 16, 16), dtype=jnp.float32)
    check(module, x4, x4 + bias_init.reshape(1, C, 1, 1))

    # 4-D NCHW path with a multi-step (>=2) parallel grid.
    C2 = 16
    bias2 = jax.random.normal(k_b2, (C2,), dtype=jnp.float32)
    module2 = AddBias(bias2)
    x4b = jax.random.normal(k_x4b, (4, C2, 32, 32), dtype=jnp.float32)
    check(module2, x4b, x4b + bias2.reshape(1, C2, 1, 1))

    # 2-D lane-dense path (N*C divisible by lcm(C, 128)).
    x2 = jax.random.normal(k_x2, (64, C), dtype=jnp.float32)
    check(module, x2, x2 + bias_init.reshape(1, C))

    # 2-D split path: lane-dense Pallas main chunk + tiny plain-add tail.
    x2b = jax.random.normal(k_x2b, (70, C), dtype=jnp.float32)
    check(module, x2b, x2b + bias_init.reshape(1, C))

    # 2-D tiny input (all tail -> plain fused add).
    x2c = jax.random.normal(k_x2c, (8, C), dtype=jnp.float32)
    check(module, x2c, x2c + bias_init.reshape(1, C))

    print("KERNEL_OK")
</pallas_src>

<mosaic_0001>
module attributes {stable_mosaic.version = 11 : i64} {
  func.func @_add_bias_kernel(%arg0: i32, %arg1: i32, %arg2: memref<8x256xf32, #tpu.memory_space<vmem>>, %arg3: memref<8x1xf32, #tpu.memory_space<vmem>>, %arg4: memref<8x256xf32, #tpu.memory_space<vmem>>) attributes {dimension_semantics = [#tpu.dimension_semantics<parallel>, #tpu.dimension_semantics<parallel>], iteration_bounds = array<i64: 1, 1>, scalar_prefetch = 0 : i64, scratch_operands = 0 : i64, tpu.core_type = #tpu.core_type<tc>, window_params = [{transform_indices = @transform_0, window_bounds = array<i64: 8, 256>}, {pipeline_mode = #tpu.pipeline_mode<synchronous>, transform_indices = @transform_1, window_bounds = array<i64: 8, 1>}, {transform_indices = @transform_2, window_bounds = array<i64: 8, 256>}]} {
    %c0 = arith.constant 0 : index
    %c0_0 = arith.constant 0 : index
    %0 = vector.load %arg2[%c0, %c0_0] : memref<8x256xf32, #tpu.memory_space<vmem>>, vector<8x256xf32>
    %c0_1 = arith.constant 0 : index
    %c0_2 = arith.constant 0 : index
    %1 = vector.load %arg3[%c0_1, %c0_2] : memref<8x1xf32, #tpu.memory_space<vmem>>, vector<8x1xf32>
    %2 = vector.broadcast %1 : vector<8x1xf32> to vector<8x256xf32>
    %3 = arith.addf %0, %2 : vector<8x256xf32>
    %c0_3 = arith.constant 0 : index
    %c0_4 = arith.constant 0 : index
    %4 = vector.load %arg4[%c0_3, %c0_4] : memref<8x256xf32, #tpu.memory_space<vmem>>, vector<8x256xf32>
    tpu.vector_store %arg4[%c0_3, %c0_4], %3 {strides = array<i32>} : memref<8x256xf32, #tpu.memory_space<vmem>>, vector<8x256xf32>,
    return
  }
  func.func @transform_0(%arg0: i32, %arg1: i32) -> (i32, i32) {
    %c0_i32 = arith.constant 0 : i32
    return %arg0, %arg1 : i32, i32
  }
  func.func @transform_1(%arg0: i32, %arg1: i32) -> (i32, i32) {
    %c0_i32 = arith.constant 0 : i32
    %c0_i32_0 = arith.constant 0 : i32
    %c0_i32_1 = arith.constant 0 : i32
    return %c0_i32, %c0_i32_0 : i32, i32
  }
  func.func @transform_2(%arg0: i32, %arg1: i32) -> (i32, i32) {
    %c0_i32 = arith.constant 0 : i32
    return %arg0, %arg1 : i32, i32
  }
}

</mosaic_0001>

<llo_original>
// kernel: tpu_custom_call.1
$region0: #{tpu_custom_call.1}
  #allocation0 [shape = 'u32[]', space=smem, size = 0x4, offset = 0x4, fixed_abs, tag = 'smem constant byte address 0x4 - core index']
  #allocation1 [shape = 'u32[144,128]{1,0:T(1,128)}', space=vmem, size = 0x12000, scoped, tag = 'internal scratch']
  %s0 = inlined_call_operand.hbm [shape: f32[8,256], index: 0, kind: input, shape index: {}]
  %s1 = inlined_call_operand.vmem [shape: f32[8,1], index: 1, kind: input, shape index: {}]
  %s2 = inlined_call_operand.hbm [shape: f32[8,256], index: 2, kind: output, shape index: {}]
  %s3 = sld [smem:[#allocation0]]
  $region22: #{tpu_custom_call.1} parent=0
    _
  %s5 = ssub.s32 1, %s3
  %s6 = scalar_select 0, %s5, %s3
  $region1: #{tpu_custom_call.1} parent=0
    #allocation2 [shape = 'u8[8192]{0}', space=vmem, size = 0x2000, scoped, tag = 'input window, operand 0, single buffered']
    #allocation3 [shape = 's32[1]{0}', space=sflag, size = 0x4, scoped, tag = 'scoped memory for tpu_custom_call.1']
    #allocation4 [shape = 's32[1]{0}', space=sflag, size = 0x4, scoped, tag = 'scoped memory for tpu_custom_call.1']
    #allocation5 [shape = 'u8[8192]{0}', space=vmem, size = 0x2000, scoped, tag = 'output window, operand 0, single buffered']
    %7 = vsyncpa [#allocation3], 0
    %8 = vsyncpa [#allocation4], 0
    // Predicated region
    $region2: #{tpu_custom_call.1} parent=1 // pred_check
      _
    $region3: #{tpu_custom_call.1} parent=1 // pred_check_branch
      %10 = sbr.rel (0) target = $region5
    $region4: #{tpu_custom_call.1} parent=1 // pred_region
      %s12 = ssub.s32 256, 256
      %13 = vsyncadd [#allocation3], %s12
      %s15 = sshll.u32 [#allocation2], 4
      %s16 = int_to_ptr.vmem [resolvable:$true] %s15
      %18 = dma.hbm_to_vmem [thread:$0]  %s0, 256, %s16, [#allocation3]
    $region5: #{tpu_custom_call.1} parent=1 // pred_fallthru
      _
    // Predicated region
    $region6: #{tpu_custom_call.1} parent=1 // pred_check
      _
    $region7: #{tpu_custom_call.1} parent=1 // pred_check_branch
      %20 = sbr.rel (0) target = $region9
    $region8: #{tpu_custom_call.1} parent=1 // pred_region
      _
    $region9: #{tpu_custom_call.1} parent=1 // pred_fallthru
      _
    // Predicated region
    $region10: #{tpu_custom_call.1} parent=1 // pred_check
      _
    $region11: #{tpu_custom_call.1} parent=1 // pred_check_branch
      %22 = sbr.rel (0) target = $region13
    $region12: #{tpu_custom_call.1} parent=1 // pred_region
      %23 = dma.done [#allocation3], 256
    $region13: #{tpu_custom_call.1} parent=1 // pred_fallthru
      _
    %v24 = vld [vmem:[#allocation2] sm:$0xff]
    %v25 = vld [vmem:[#allocation2 + $0x8] sm:$0xff]
    %v26 = vld [vmem:[%s1] sm:$0xff]
    %28 = vset.pattern.permute.xlu0 0
    %29 = vperm.xlu0 %28, %v26
    %v30 = vpop.permute.xlu0 %29
    %v32 = vadd.f32 %v24, %v30
    %v33 = vadd.f32 %v25, %v30
    %34 = vst [vmem:[#allocation5] sm:$0xff] %v32
    %35 = vst [vmem:[#allocation5 + $0x8] sm:$0xff] %v33
    // Predicated region
    $region14: #{tpu_custom_call.1} parent=1 // pred_check
      _
    $region15: #{tpu_custom_call.1} parent=1 // pred_check_branch
      %37 = sbr.rel (0) target = $region17
    $region16: #{tpu_custom_call.1} parent=1 // pred_region
      %s39 = ssub.s32 256, 256
      %40 = vsyncadd [#allocation4], %s39
      %s42 = sshll.u32 [#allocation5], 4
      %s43 = int_to_ptr.vmem [resolvable:$true] %s42
      %45 = dma.vmem_to_hbm [thread:$0]  %s43, 256, %s2, [#allocation4]
    $region17: #{tpu_custom_call.1} parent=1 // pred_fallthru
      _
    // Predicated region
    $region18: #{tpu_custom_call.1} parent=1 // pred_check
      _
    $region19: #{tpu_custom_call.1} parent=1 // pred_check_branch
      %47 = sbr.rel (0) target = $region21
    $region20: #{tpu_custom_call.1} parent=1 // pred_region
      %48 = dma.done [#allocation4], 256
    $region21: #{tpu_custom_call.1} parent=1 // pred_fallthru
      _
    %49 = vsyncpa [#allocation3], 1
    %50 = vsyncpa [#allocation4], 1

</llo_original>
